<compile_context>
chip_gen: v7x
topology: tpu7x:2x2x1
jax: 0.10.0
libtpu: 0.0.40
codegen_flags: <defaults>
</compile_context>

<pallas_src>
import jax
import jax.numpy as jnp
from jax.experimental import pallas as pl
from jax.experimental.pallas import tpu as pltpu


def _reslayer_kernel(x_ref, w_ref, xres_ref, b_ref, o_ref, acc_ref):
    k = pl.program_id(2)

    @pl.when(k == 0)
    def _init():
        acc_ref[...] = jnp.zeros_like(acc_ref)

    # MXU matmul into the f32 accumulator; the k-loop body stays pure MXU + add.
    acc_ref[...] += jnp.dot(
        x_ref[...], w_ref[...], preferred_element_type=jnp.float32
    )

    @pl.when(k == pl.num_programs(2) - 1)
    def _finalize():
        # bias + residual + ReLU once, on the VPU, after the reduction is done.
        y = acc_ref[...] + b_ref[...] + xres_ref[...].astype(jnp.float32)
        o_ref[...] = jnp.maximum(y, 0.0).astype(o_ref.dtype)


def _pick_tile(dim, target, align):
    """Largest multiple of `align` <= target that evenly divides `dim`;
    falls back to the full dim (always a legal block shape)."""
    if dim <= target:
        return dim
    t = (target // align) * align
    while t >= align:
        if dim % t == 0:
            return t
        t -= align
    return dim


def reslayer(x, w_io, bias, *, tm=256, tn=256, tk=512):
    """Fused Linear + residual + ReLU.

    x:    (B, H) float32
    w_io: (H_in, H_out) float32 — PyTorch weight.T, transposed once at load time
    bias: (H_out,) float32
    """
    B, H_in = x.shape
    wk, H_out = w_io.shape
    assert wk == H_in, "weight inner dim mismatch"
    assert H_in == H_out, "residual add requires I == O"

    tm = _pick_tile(B, tm, 8)
    tn = _pick_tile(H_out, tn, 128)
    tk = _pick_tile(H_in, tk, 128)
    grid = (B // tm, H_out // tn, H_in // tk)

    b2 = bias.reshape(1, H_out)

    flops = 2 * B * H_in * H_out
    bytes_accessed = 4 * (B * H_in + H_in * H_out + B * H_out + H_out + B * H_out)

    return pl.pallas_call(
        _reslayer_kernel,
        out_shape=jax.ShapeDtypeStruct((B, H_out), x.dtype),
        grid_spec=pltpu.PrefetchScalarGridSpec(
            num_scalar_prefetch=0,
            grid=grid,
            in_specs=[
                # matmul LHS tile: rows i, reduction slice k
                pl.BlockSpec((tm, tk), lambda i, j, k: (i, k)),
                # weight tile: reduction slice k, output columns j
                pl.BlockSpec((tk, tn), lambda i, j, k: (k, j)),
                # residual tile: rows i, output columns j (constant across k
                # -> DMA'd once per (i, j) tile)
                pl.BlockSpec((tm, tn), lambda i, j, k: (i, j)),
                # bias tile: output columns j
                pl.BlockSpec((1, tn), lambda i, j, k: (0, j)),
            ],
            out_specs=pl.BlockSpec((tm, tn), lambda i, j, k: (i, j)),
            scratch_shapes=[pltpu.VMEM((tm, tn), jnp.float32)],
        ),
        compiler_params=pltpu.CompilerParams(
            dimension_semantics=("parallel", "parallel", "arbitrary"),
        ),
        cost_estimate=pl.CostEstimate(
            flops=flops, transcendentals=0, bytes_accessed=bytes_accessed
        ),
    )(x, w_io, x, b2)


def reslayer_ref(x, w_io, bias):
    # plain-JAX reference of the PyTorch forward (w_io is weight.T)
    return jnp.maximum(x @ w_io + bias + x, 0.0)


def _make_params(key, H):
    kw, kb = jax.random.split(key)
    # kaiming_normal_(fan_in, relu): std = sqrt(2 / fan_in), PyTorch layout (O, I)
    std = (2.0 / H) ** 0.5
    weight_oi = std * jax.random.normal(kw, (H, H), dtype=jnp.float32)
    # nn.Linear default bias init: uniform(-1/sqrt(fan_in), 1/sqrt(fan_in))
    bound = 1.0 / (H ** 0.5)
    bias = jax.random.uniform(kb, (H,), dtype=jnp.float32,
                              minval=-bound, maxval=bound)
    # One-time transpose at parameter-load time (outside the per-call path).
    w_io = jnp.asarray(weight_oi.T)
    return w_io, bias


if __name__ == "__main__":
    key = jax.random.PRNGKey(0)
    k_small, k_big, k_px, k_bx = jax.random.split(key, 4)

    # --- small shape consistent with the module (B=8, H=32): single-block path
    B, H = 8, 32
    x = jax.random.normal(k_px, (B, H), dtype=jnp.float32)
    w_io, bias = _make_params(k_small, H)

    out = jax.block_until_ready(reslayer(x, w_io, bias))
    ref = reslayer_ref(x, w_io, bias)
    assert out.shape == ref.shape
    assert jnp.allclose(out, ref, atol=1e-5, rtol=1e-5), "small-shape mismatch"

    # --- moderate shape to exercise the tiled (i, j, k) pipelined path
    B2, H2 = 256, 512
    x2 = jax.random.normal(k_bx, (B2, H2), dtype=jnp.float32)
    w_io2, bias2 = _make_params(k_big, H2)

    out2 = jax.block_until_ready(reslayer(x2, w_io2, bias2))
    ref2 = reslayer_ref(x2, w_io2, bias2)
    assert jnp.allclose(out2, ref2, atol=1e-4, rtol=1e-4), "tiled-shape mismatch"

    print("KERNEL_OK")
</pallas_src>

<mosaic_0001>
module attributes {stable_mosaic.version = 11 : i64} {
  func.func @_reslayer_kernel(%arg0: i32, %arg1: i32, %arg2: i32, %arg3: memref<8x32xf32, #tpu.memory_space<vmem>>, %arg4: memref<32x32xf32, #tpu.memory_space<vmem>>, %arg5: memref<8x32xf32, #tpu.memory_space<vmem>>, %arg6: memref<1x32xf32, #tpu.memory_space<vmem>>, %arg7: memref<8x32xf32, #tpu.memory_space<vmem>>, %arg8: memref<8x32xf32, #tpu.memory_space<vmem>>) attributes {dimension_semantics = [#tpu.dimension_semantics<parallel>, #tpu.dimension_semantics<parallel>, #tpu.dimension_semantics<arbitrary>], iteration_bounds = array<i64: 1, 1, 1>, scalar_prefetch = 0 : i64, scratch_operands = 1 : i64, tpu.core_type = #tpu.core_type<tc>, window_params = [{transform_indices = @transform_0, window_bounds = array<i64: 8, 32>}, {transform_indices = @transform_1, window_bounds = array<i64: 32, 32>}, {transform_indices = @transform_2, window_bounds = array<i64: 8, 32>}, {transform_indices = @transform_3, window_bounds = array<i64: 1, 32>}, {transform_indices = @transform_4, window_bounds = array<i64: 8, 32>}]} {
    %c0_i32 = arith.constant 0 : i32
    %0 = arith.cmpi eq, %arg2, %c0_i32 : i32
    %1 = arith.extui %0 : i1 to i32
    %c0_i32_0 = arith.constant 0 : i32
    %2 = arith.cmpi ne, %1, %c0_i32_0 : i32
    scf.if %2 {
      %cst_10 = arith.constant 0.000000e+00 : f32
      %12 = vector.broadcast %cst_10 : f32 to vector<8x32xf32>
      %c0_11 = arith.constant 0 : index
      %c0_12 = arith.constant 0 : index
      %13 = vector.load %arg8[%c0_11, %c0_12] : memref<8x32xf32, #tpu.memory_space<vmem>>, vector<8x32xf32>
      tpu.vector_store %arg8[%c0_11, %c0_12], %12 {strides = array<i32>} : memref<8x32xf32, #tpu.memory_space<vmem>>, vector<8x32xf32>,
    } else {
    }
    %c0 = arith.constant 0 : index
    %c0_1 = arith.constant 0 : index
    %3 = vector.load %arg8[%c0, %c0_1] : memref<8x32xf32, #tpu.memory_space<vmem>>, vector<8x32xf32>
    %c0_2 = arith.constant 0 : index
    %c0_3 = arith.constant 0 : index
    %4 = vector.load %arg3[%c0_2, %c0_3] : memref<8x32xf32, #tpu.memory_space<vmem>>, vector<8x32xf32>
    %c0_4 = arith.constant 0 : index
    %c0_5 = arith.constant 0 : index
    %5 = vector.load %arg4[%c0_4, %c0_5] : memref<32x32xf32, #tpu.memory_space<vmem>>, vector<32x32xf32>
    %cst = arith.constant dense<0.000000e+00> : vector<8x32xf32>
    %6 = tpu.matmul %4, %5, %cst {dimension_numbers = #tpu.dot_dimension_numbers<[1], [0], [0], [1], [0, 0, 1, 1], [], []>} : vector<8x32xf32>, vector<32x32xf32>, vector<8x32xf32> -> vector<8x32xf32>
    %7 = arith.addf %3, %6 : vector<8x32xf32>
    %c0_6 = arith.constant 0 : index
    %c0_7 = arith.constant 0 : index
    %8 = vector.load %arg8[%c0_6, %c0_7] : memref<8x32xf32, #tpu.memory_space<vmem>>, vector<8x32xf32>
    tpu.vector_store %arg8[%c0_6, %c0_7], %7 {strides = array<i32>} : memref<8x32xf32, #tpu.memory_space<vmem>>, vector<8x32xf32>,
    %c0_i32_8 = arith.constant 0 : i32
    %9 = arith.cmpi eq, %arg2, %c0_i32_8 : i32
    %10 = arith.extui %9 : i1 to i32
    %c0_i32_9 = arith.constant 0 : i32
    %11 = arith.cmpi ne, %10, %c0_i32_9 : i32
    scf.if %11 {
      %c0_10 = arith.constant 0 : index
      %c0_11 = arith.constant 0 : index
      %12 = vector.load %arg8[%c0_10, %c0_11] : memref<8x32xf32, #tpu.memory_space<vmem>>, vector<8x32xf32>
      %c0_12 = arith.constant 0 : index
      %c0_13 = arith.constant 0 : index
      %13 = vector.load %arg6[%c0_12, %c0_13] : memref<1x32xf32, #tpu.memory_space<vmem>>, vector<1x32xf32>
      %14 = vector.broadcast %13 : vector<1x32xf32> to vector<8x32xf32>
      %15 = arith.addf %12, %14 : vector<8x32xf32>
      %c0_14 = arith.constant 0 : index
      %c0_15 = arith.constant 0 : index
      %16 = vector.load %arg5[%c0_14, %c0_15] : memref<8x32xf32, #tpu.memory_space<vmem>>, vector<8x32xf32>
      %17 = arith.addf %15, %16 : vector<8x32xf32>
      %cst_16 = arith.constant 0.000000e+00 : f32
      %18 = vector.broadcast %cst_16 : f32 to vector<8x32xf32>
      %19 = arith.maximumf %17, %18 : vector<8x32xf32>
      %c0_17 = arith.constant 0 : index
      %c0_18 = arith.constant 0 : index
      %20 = vector.load %arg7[%c0_17, %c0_18] : memref<8x32xf32, #tpu.memory_space<vmem>>, vector<8x32xf32>
      tpu.vector_store %arg7[%c0_17, %c0_18], %19 {strides = array<i32>} : memref<8x32xf32, #tpu.memory_space<vmem>>, vector<8x32xf32>,
    } else {
    }
    return
  }
  func.func @transform_0(%arg0: i32, %arg1: i32, %arg2: i32) -> (i32, i32) {
    %c0_i32 = arith.constant 0 : i32
    return %arg0, %arg2 : i32, i32
  }
  func.func @transform_1(%arg0: i32, %arg1: i32, %arg2: i32) -> (i32, i32) {
    %c0_i32 = arith.constant 0 : i32
    return %arg2, %arg1 : i32, i32
  }
  func.func @transform_2(%arg0: i32, %arg1: i32, %arg2: i32) -> (i32, i32) {
    %c0_i32 = arith.constant 0 : i32
    return %arg0, %arg1 : i32, i32
  }
  func.func @transform_3(%arg0: i32, %arg1: i32, %arg2: i32) -> (i32, i32) {
    %c0_i32 = arith.constant 0 : i32
    %c0_i32_0 = arith.constant 0 : i32
    return %c0_i32, %arg1 : i32, i32
  }
  func.func @transform_4(%arg0: i32, %arg1: i32, %arg2: i32) -> (i32, i32) {
    %c0_i32 = arith.constant 0 : i32
    return %arg0, %arg1 : i32, i32
  }
}

</mosaic_0001>

<llo_original>
// kernel: tpu_custom_call.1
$region0: #{tpu_custom_call.1}
  #allocation0 [shape = 'u32[]', space=smem, size = 0x4, offset = 0x4, fixed_abs, tag = 'smem constant byte address 0x4 - core index']
  #allocation1 [shape = 'u32[144,128]{1,0:T(1,128)}', space=vmem, size = 0x12000, scoped, tag = 'internal scratch']
  #allocation2 [shape = 'f32[8,32]{1,0:T(8,128)}', space=vmem, size = 0x1000, scoped, tag = 'scratch operand']
  %s0 = inlined_call_operand.hbm [shape: f32[8,32], index: 0, kind: input, shape index: {}]
  %s1 = inlined_call_operand.hbm [shape: f32[32,32], index: 1, kind: input, shape index: {}]
  %s2 = inlined_call_operand.hbm [shape: f32[8,32], index: 2, kind: input, shape index: {}]
  %s3 = inlined_call_operand.vmem [shape: f32[1,32], index: 3, kind: input, shape index: {}]
  %s4 = inlined_call_operand.hbm [shape: f32[8,32], index: 4, kind: output, shape index: {}]
  %s5 = sld [smem:[#allocation0]]
  $region46: #{tpu_custom_call.1} parent=0
    _
  %s7 = ssub.s32 1, %s5
  %s8 = scalar_select 0, %s7, %s5
  $region1: #{tpu_custom_call.1} parent=0
    #allocation3 [shape = 'u8[4096]{0}', space=vmem, size = 0x1000, scoped, tag = 'input window, operand 0, single buffered']
    #allocation4 [shape = 's32[1]{0}', space=sflag, size = 0x4, scoped, tag = 'scoped memory for tpu_custom_call.1']
    #allocation5 [shape = 's32[1]{0}', space=sflag, size = 0x4, scoped, tag = 'scoped memory for tpu_custom_call.1']
    #allocation6 [shape = 'u8[16384]{0}', space=vmem, size = 0x4000, scoped, tag = 'input window, operand 1, single buffered']
    #allocation7 [shape = 's32[1]{0}', space=sflag, size = 0x4, scoped, tag = 'scoped memory for tpu_custom_call.1']
    #allocation8 [shape = 'u8[4096]{0}', space=vmem, size = 0x1000, scoped, tag = 'input window, operand 2, single buffered']
    #allocation9 [shape = 'u8[4096]{0}', space=vmem, size = 0x1000, scoped, tag = 'output window, operand 0, single buffered']
    %9 = vsyncpa [#allocation4], 0
    %10 = vsyncpa [#allocation7], 0
    %11 = vsyncpa [#allocation5], 0
    // Predicated region
    $region2: #{tpu_custom_call.1} parent=1 // pred_check
      _
    $region3: #{tpu_custom_call.1} parent=1 // pred_check_branch
      %13 = sbr.rel (0) target = $region5
    $region4: #{tpu_custom_call.1} parent=1 // pred_region
      %s15 = ssub.s32 128, 128
      %16 = vsyncadd [#allocation4], %s15
      %s18 = sshll.u32 [#allocation3], 4
      %s19 = int_to_ptr.vmem [resolvable:$true] %s18
      %21 = dma.hbm_to_vmem [thread:$0]  %s0, 128, %s19, [#allocation4]
    $region5: #{tpu_custom_call.1} parent=1 // pred_fallthru
      _
    // Predicated region
    $region6: #{tpu_custom_call.1} parent=1 // pred_check
      _
    $region7: #{tpu_custom_call.1} parent=1 // pred_check_branch
      %23 = sbr.rel (0) target = $region9
    $region8: #{tpu_custom_call.1} parent=1 // pred_region
      %s25 = ssub.s32 512, 512
      %26 = vsyncadd [#allocation7], %s25
      %s27 = sshll.u32 [#allocation6], 4
      %s28 = int_to_ptr.vmem [resolvable:$true] %s27
      %33 = dma.hbm_to_vmem [thread:$0]  %s1, 512, %s28, [#allocation7], 128, 128, 8
    $region9: #{tpu_custom_call.1} parent=1 // pred_fallthru
      _
    // Predicated region
    $region10: #{tpu_custom_call.1} parent=1 // pred_check
      _
    $region11: #{tpu_custom_call.1} parent=1 // pred_check_branch
      %35 = sbr.rel (0) target = $region13
    $region12: #{tpu_custom_call.1} parent=1 // pred_region
      %s37 = ssub.s32 128, 128
      %38 = vsyncadd [#allocation7], %s37
      %s40 = sshll.u32 [#allocation8], 4
      %s41 = int_to_ptr.vmem [resolvable:$true] %s40
      %43 = dma.hbm_to_vmem [thread:$0]  %s2, 128, %s41, [#allocation7]
    $region13: #{tpu_custom_call.1} parent=1 // pred_fallthru
      _
    // Predicated region
    $region14: #{tpu_custom_call.1} parent=1 // pred_check
      _
    $region15: #{tpu_custom_call.1} parent=1 // pred_check_branch
      %45 = sbr.rel (0) target = $region17
    $region16: #{tpu_custom_call.1} parent=1 // pred_region
      _
    $region17: #{tpu_custom_call.1} parent=1 // pred_fallthru
      _
    // Predicated region
    $region18: #{tpu_custom_call.1} parent=1 // pred_check
      _
    $region19: #{tpu_custom_call.1} parent=1 // pred_check_branch
      %47 = sbr.rel (0) target = $region21
    $region20: #{tpu_custom_call.1} parent=1 // pred_region
      %48 = dma.done [#allocation4], 128
    $region21: #{tpu_custom_call.1} parent=1 // pred_fallthru
      _
    // Predicated region
    $region22: #{tpu_custom_call.1} parent=1 // pred_check
      _
    $region23: #{tpu_custom_call.1} parent=1 // pred_check_branch
      %50 = sbr.rel (0) target = $region25
    $region24: #{tpu_custom_call.1} parent=1 // pred_region
      %51 = dma.done [#allocation7], 512
    $region25: #{tpu_custom_call.1} parent=1 // pred_fallthru
      _
    // Predicated region
    $region26: #{tpu_custom_call.1} parent=1 // pred_check
      _
    $region27: #{tpu_custom_call.1} parent=1 // pred_check_branch
      %53 = sbr.rel (0) target = $region29
    $region28: #{tpu_custom_call.1} parent=1 // pred_region
      %54 = dma.done [#allocation7], 128
    $region29: #{tpu_custom_call.1} parent=1 // pred_fallthru
      _
    %p55 = scmp.eq.s32.totalorder 0, 0
    // Predicated region
    $region30: #{tpu_custom_call.1} parent=1 // pred_check
      %p56 = pneg %p55
    $region31: #{tpu_custom_call.1} parent=1 // pred_check_branch
      %58 = sbr.rel (%p56) target = $region33
    $region32: #{tpu_custom_call.1} parent=1 // pred_region
      %vm59 = vcmask 261120
      %60 = vst.msk [vmem:[#allocation2] sm:$0xff] %vm59, 0.0
    $region33: #{tpu_custom_call.1} parent=1 // pred_fallthru
      _
    %v61 = vld [vmem:[#allocation2] sm:$0xff]
    %v62 = vld [vmem:[#allocation3] sm:$0xff]
    %v63 = vld [vmem:[#allocation6] sm:$0xff]
    %v64 = vld [vmem:[#allocation6 + $0x8] sm:$0xff]
    %v65 = vld [vmem:[#allocation6 + $0x10] sm:$0xff]
    %v66 = vld [vmem:[#allocation6 + $0x18] sm:$0xff]
    %vm67 = vcmask 261120
    %v69 = vsel %vm67, %v62, 0
    %71 = vmatprep.subr.mxu0 0.0
    %72 = vmatpush1.msra.mxu0 %v63
    %73 = vmatprep.subr.mxu0 0.0
    %74 = vmatpush1.msra.mxu0 %v64
    %75 = vmatprep.subr.mxu0 0.0
    %76 = vmatpush1.msra.mxu0 %v65
    %77 = vmatprep.subr.mxu0 0.0
    %78 = vmatpush1.msra.mxu0 %v66
    %79 = vmatprep.subr.mxu0 0.0
    %80 = vmatpush1.msra.mxu0 0.0
    %81 = vmatprep.subr.mxu0 0.0
    %82 = vmatpush1.msra.mxu0 0.0
    %83 = vmatprep.subr.mxu0 0.0
    %84 = vmatpush1.msra.mxu0 0.0
    %85 = vmatprep.subr.mxu0 0.0
    %86 = vmatpush1.msra.mxu0 0.0
    %87 = vmatprep.subr.mxu0 0.0
    %88 = vmatpush1.msra.mxu0 0.0
    %89 = vmatprep.subr.mxu0 0.0
    %90 = vmatpush1.msra.mxu0 0.0
    %91 = vmatprep.subr.mxu0 0.0
    %92 = vmatpush1.msra.mxu0 0.0
    %93 = vmatprep.subr.mxu0 0.0
    %94 = vmatpush1.msra.mxu0 0.0
    %95 = vmatprep.subr.mxu0 0.0
    %96 = vmatpush1.msra.mxu0 0.0
    %97 = vmatprep.subr.mxu0 0.0
    %98 = vmatpush1.msra.mxu0 0.0
    %99 = vmatprep.subr.mxu0 0.0
    %100 = vmatpush1.msra.mxu0 0.0
    %101 = vmatprep.subr.mxu0 0.0
    %102 = vmatpush1.msra.mxu0 0.0
    %103 = vmatprep.subr.mxu0 0.0
    %104 = vmatpush1.msra.mxu0 0.0
    %105 = vmatprep.subr.mxu0 0.0
    %106 = vmatpush1.msra.mxu0 0.0
    %107 = vmatprep.subr.mxu0 0.0
    %108 = vmatpush1.msra.mxu0 0.0
    %109 = vmatprep.subr.mxu0 0.0
    %110 = vmatpush1.msra.mxu0 0.0
    %111 = vmatprep.subr.mxu0 0.0
    %112 = vmatpush1.msra.mxu0 0.0
    %113 = vmatprep.subr.mxu0 0.0
    %114 = vmatpush1.msra.mxu0 0.0
    %115 = vmatprep.subr.mxu0 0.0
    %116 = vmatpush1.msra.mxu0 0.0
    %117 = vmatprep.subr.mxu0 0.0
    %118 = vmatpush1.msra.mxu0 0.0
    %119 = vmatprep.subr.mxu0 0.0
    %120 = vmatpush1.msra.mxu0 0.0
    %121 = vmatprep.subr.mxu0 0.0
    %122 = vmatpush1.msra.mxu0 0.0
    %123 = vmatprep.subr.mxu0 0.0
    %124 = vmatpush1.msra.mxu0 0.0
    %125 = vmatprep.subr.mxu0 0.0
    %126 = vmatpush1.msra.mxu0 0.0
    %127 = vmatprep.subr.mxu0 0.0
    %128 = vmatpush1.msra.mxu0 0.0
    %129 = vmatprep.subr.mxu0 0.0
    %130 = vmatpush1.msra.mxu0 0.0
    %131 = vmatprep.subr.mxu0 0.0
    %132 = vmatpush1.msra.mxu0 0.0
    %133 = vmatprep.subr.mxu0 0.0
    %134 = vmatpush1.msra.mxu0 0.0
    %135 = vmatprep.mubr.f32.mxu0 0.0
    %136 = vmatmul.mubr.f32.gmra.mrb[0].mxu0 %v69
    %v137 = vpop.f32.mrb[0].mxu0
    %v138 = vadd.f32 0.0, %v137
    %v139 = vpop.f32.mrb[0].mxu0
    %140 = vdwg.mxu0
    %v141 = vadd.f32 %v61, %v138
    %142 = vst.msk [vmem:[#allocation2] sm:$0xff] %vm67, %v141
    // Predicated region
    $region34: #{tpu_custom_call.1} parent=1 // pred_check
      %p143 = pneg %p55
    $region35: #{tpu_custom_call.1} parent=1 // pred_check_branch
      %145 = sbr.rel (%p143) target = $region37
    $region36: #{tpu_custom_call.1} parent=1 // pred_region
      %v146 = vld [vmem:[#allocation2] sm:$0xff]
      %v147 = vld [vmem:[%s3] sm:$0x1]
      %v149 = vlaneseq
      %v150 = vshrl.u32 %v149, 7
      %v151 = vsub.s32 0, %v150
      %v152 = vrot.slane %v147, %v151
      %v154 = vadd.f32 %v146, %v152
      %v155 = vld [vmem:[#allocation8] sm:$0xff]
      %v156 = vadd.f32 %v154, %v155
      %v157 = vmax.f32 %v156, 0.0
      %158 = vst.msk [vmem:[#allocation9] sm:$0xff] %vm67, %v157
    $region37: #{tpu_custom_call.1} parent=1 // pred_fallthru
      _
    // Predicated region
    $region38: #{tpu_custom_call.1} parent=1 // pred_check
      _
    $region39: #{tpu_custom_call.1} parent=1 // pred_check_branch
      %160 = sbr.rel (0) target = $region41
    $region40: #{tpu_custom_call.1} parent=1 // pred_region
      %s162 = ssub.s32 128, 128
      %163 = vsyncadd [#allocation5], %s162
      %s165 = sshll.u32 [#allocation9], 4
      %s166 = int_to_ptr.vmem [resolvable:$true] %s165
      %168 = dma.vmem_to_hbm [thread:$0]  %s166, 128, %s4, [#allocation5]
    $region41: #{tpu_custom_call.1} parent=1 // pred_fallthru
      _
    // Predicated region
    $region42: #{tpu_custom_call.1} parent=1 // pred_check
      _
    $region43: #{tpu_custom_call.1} parent=1 // pred_check_branch
      %170 = sbr.rel (0) target = $region45
    $region44: #{tpu_custom_call.1} parent=1 // pred_region
      %171 = dma.done [#allocation5], 128
    $region45: #{tpu_custom_call.1} parent=1 // pred_fallthru
      _
    %172 = vsyncpa [#allocation4], 1
    %173 = vsyncpa [#allocation7], 1
    %174 = vsyncpa [#allocation5], 1

</llo_original>
